<compile_context>
chip_gen: v5e
topology: v5e:2x2
jax: 0.10.0
libtpu: 0.0.40
codegen_flags: <defaults>
</compile_context>

<pallas_src>
import functools

import jax
import jax.numpy as jnp
from jax.experimental import pallas as pl
from jax.experimental.pallas import tpu as pltpu


def _round_up(v, m):
    return ((v + m - 1) // m) * m


def _cdiv(a, b):
    return -(-a // b)


def _std_kernel(x_ref, o_ref, sum_ref, sq_ref, *, inv_n, inv_nm1, hw, tk,
                needs_mask):
    # x_ref: (tr, tk) tile of [rows = b*c, lanes = h*w chunk]
    # o_ref: (tr, 128) lane-dense std block for this row tile (lane 0 used)
    j = pl.program_id(1)
    last = pl.num_programs(1) - 1

    @pl.when(j == 0)
    def _init():
        sum_ref[...] = jnp.zeros_like(sum_ref)
        sq_ref[...] = jnp.zeros_like(sq_ref)

    def _accumulate(x):
        # single traversal of the tile: sum and sum-of-squares together
        sum_ref[...] += jnp.sum(x, axis=-1, keepdims=True)
        sq_ref[...] += jnp.sum(x * x, axis=-1, keepdims=True)

    if needs_mask:
        # hw is not a multiple of tk: the last lane chunk overhangs the array,
        # so zero the out-of-range lanes (OOB reads hold garbage).  The mask
        # cost (iota + cmp + select) is confined to the single last chunk.
        @pl.when(j != last)
        def _body():
            _accumulate(x_ref[...].astype(jnp.float32))

        @pl.when(j == last)
        def _tail():
            x = x_ref[...].astype(jnp.float32)
            col = j * tk + jax.lax.broadcasted_iota(jnp.int32, x.shape, 1)
            _accumulate(jnp.where(col < hw, x, 0.0))
    else:
        _accumulate(x_ref[...].astype(jnp.float32))

    @pl.when(j == last)
    def _finalize():
        s = sum_ref[...]                                    # (tr, 1)
        var = (sq_ref[...] - s * s * inv_n) * inv_nm1       # unbiased (ddof=1)
        var = jnp.maximum(var, 0.0)                         # clamp rounding negatives
        std_col = jnp.sqrt(var)                             # (tr, 1)
        # lane-broadcast -> unmasked lane-dense store; wrapper reads lane 0
        o_ref[...] = jnp.broadcast_to(std_col, o_ref.shape).astype(o_ref.dtype)


def _tpu_vmem_config():
    vmem_cap = 64 * 1024 * 1024  # conservative default = v7x per-TC VMEM
    try:
        vmem_cap = int(pltpu.get_tpu_info().vmem_capacity_bytes)
    except Exception:
        pass
    # v7x: 64 MiB VMEM per TensorCore and 2 TCs/chip; v5e/v6e: 128 MiB, 1 TC.
    num_cores = 2 if vmem_cap <= 64 * 1024 * 1024 else 1
    vmem_limit = min((vmem_cap * 3) // 4, 64 * 1024 * 1024)
    # ~40% of the limit per input block: 2 (double-buffered) input blocks plus
    # the small output/scratch buffers and compiler scratch stay under limit.
    block_budget = max(8 * 128 * 4, (vmem_limit * 2) // 5)
    return vmem_limit, block_budget, num_cores


def std_pool(x):
    """StdPool forward: unbiased std over spatial dims -> (b, c, 1, 1)."""
    b, c, h, w = x.shape
    bc = b * c
    hw = h * w
    x2 = x.reshape(bc, hw)          # contiguous merge, no copy
    itemsize = x2.dtype.itemsize

    vmem_limit, block_budget, num_cores = _tpu_vmem_config()

    # ---- spatial (lane) chunk tk: full extent if small, else 128-multiple chunks ----
    max_tk = 8192
    if hw <= max_tk:
        tk = hw
        g_k = 1
        needs_mask = False
    else:
        n_chunks = _cdiv(hw, max_tk)
        tk = _round_up(_cdiv(hw, n_chunks), 128)
        g_k = _cdiv(hw, tk)
        needs_mask = (hw % tk) != 0

    # ---- row (sublane) tile tr: as large as the block budget allows ----
    row_align = max(8, 32 // max(1, itemsize))   # 8 for f32, 16 for bf16
    tr_cap = (block_budget // (tk * itemsize)) // row_align * row_align
    tr_cap = max(row_align, min(2048, tr_cap))
    tr = min(tr_cap, _round_up(bc, row_align))
    if num_cores > 1 and bc > row_align:
        # v7x: keep >= 2 row tiles so the "parallel" axis shards across the
        # two TensorCores.  Single-TC parts keep the full tile.
        tr = min(tr, _round_up(_cdiv(bc, 2), row_align))
    g_rows = _cdiv(bc, tr)
    out_rows = g_rows * tr          # output fully covered (no store overhang)

    inv_n = 1.0 / float(hw)
    # ddof=1; hw == 1 yields NaN just like torch's .std()
    inv_nm1 = 1.0 / float(hw - 1) if hw > 1 else float("inf")

    kernel = functools.partial(_std_kernel, inv_n=inv_n, inv_nm1=inv_nm1,
                               hw=hw, tk=tk, needs_mask=needs_mask)

    out = pl.pallas_call(
        kernel,
        out_shape=jax.ShapeDtypeStruct((out_rows, 128), x.dtype),
        grid_spec=pltpu.PrefetchScalarGridSpec(
            num_scalar_prefetch=0,
            grid=(g_rows, g_k),                       # reduction axis last
            in_specs=[pl.BlockSpec((tr, tk), lambda i, j: (i, j))],
            out_specs=pl.BlockSpec((tr, 128), lambda i, j: (i, 0)),
            scratch_shapes=[
                pltpu.VMEM((tr, 1), jnp.float32),     # running sum
                pltpu.VMEM((tr, 1), jnp.float32),     # running sum of squares
            ],
        ),
        compiler_params=pltpu.CompilerParams(
            dimension_semantics=("parallel", "arbitrary"),
            vmem_limit_bytes=vmem_limit,
        ),
        cost_estimate=pl.CostEstimate(
            flops=3 * bc * hw,
            transcendentals=bc,
            bytes_accessed=bc * hw * itemsize + out_rows * 128 * itemsize,
        ),
    )(x2)

    return out[:bc, 0].reshape(b, c, 1, 1)


if __name__ == "__main__":
    key = jax.random.PRNGKey(0)
    b, c, h, w = 2, 4, 16, 16
    x = jax.random.normal(key, (b, c, h, w), dtype=jnp.float32)

    out = std_pool(x)
    jax.block_until_ready(out)

    # sanity check against plain-JAX reference (unbiased std, ddof=1)
    ref = jnp.std(x.reshape(b, c, -1), axis=2, ddof=1).reshape(b, c, 1, 1)
    assert out.shape == (b, c, 1, 1)
    assert jnp.allclose(out, ref, rtol=1e-5, atol=1e-5)

    print("KERNEL_OK")
</pallas_src>

<mosaic_0001>
module attributes {stable_mosaic.version = 11 : i64} {
  func.func @_std_kernel(%arg0: i32, %arg1: i32, %arg2: memref<8x256xf32, #tpu.memory_space<vmem>>, %arg3: memref<8x128xf32, #tpu.memory_space<vmem>>, %arg4: memref<8x1xf32, #tpu.memory_space<vmem>>, %arg5: memref<8x1xf32, #tpu.memory_space<vmem>>) attributes {dimension_semantics = [#tpu.dimension_semantics<parallel>, #tpu.dimension_semantics<arbitrary>], iteration_bounds = array<i64: 1, 1>, scalar_prefetch = 0 : i64, scratch_operands = 2 : i64, tpu.core_type = #tpu.core_type<tc>, window_params = [{transform_indices = @transform_0, window_bounds = array<i64: 8, 256>}, {transform_indices = @transform_1, window_bounds = array<i64: 8, 128>}]} {
    %c0_i32 = arith.constant 0 : i32
    %0 = arith.cmpi eq, %arg1, %c0_i32 : i32
    %1 = arith.extui %0 : i1 to i32
    %c0_i32_0 = arith.constant 0 : i32
    %2 = arith.cmpi ne, %1, %c0_i32_0 : i32
    scf.if %2 {
      %cst_13 = arith.constant 0.000000e+00 : f32
      %18 = vector.broadcast %cst_13 : f32 to vector<8x1xf32>
      %c0_14 = arith.constant 0 : index
      %c0_15 = arith.constant 0 : index
      %19 = vector.load %arg4[%c0_14, %c0_15] : memref<8x1xf32, #tpu.memory_space<vmem>>, vector<8x1xf32>
      tpu.vector_store %arg4[%c0_14, %c0_15], %18 {strides = array<i32>} : memref<8x1xf32, #tpu.memory_space<vmem>>, vector<8x1xf32>,
      %cst_16 = arith.constant 0.000000e+00 : f32
      %20 = vector.broadcast %cst_16 : f32 to vector<8x1xf32>
      %c0_17 = arith.constant 0 : index
      %c0_18 = arith.constant 0 : index
      %21 = vector.load %arg5[%c0_17, %c0_18] : memref<8x1xf32, #tpu.memory_space<vmem>>, vector<8x1xf32>
      tpu.vector_store %arg5[%c0_17, %c0_18], %20 {strides = array<i32>} : memref<8x1xf32, #tpu.memory_space<vmem>>, vector<8x1xf32>,
    } else {
    }
    %c0 = arith.constant 0 : index
    %c0_1 = arith.constant 0 : index
    %3 = vector.load %arg2[%c0, %c0_1] : memref<8x256xf32, #tpu.memory_space<vmem>>, vector<8x256xf32>
    %c0_2 = arith.constant 0 : index
    %c0_3 = arith.constant 0 : index
    %4 = vector.load %arg4[%c0_2, %c0_3] : memref<8x1xf32, #tpu.memory_space<vmem>>, vector<8x1xf32>
    %cst = arith.constant dense<0.000000e+00> : vector<8xf32>
    %5 = vector.multi_reduction <add>, %3, %cst [1] : vector<8x256xf32> to vector<8xf32>
    %6 = vector.shape_cast %5 : vector<8xf32> to vector<8x1xf32>
    %7 = arith.addf %4, %6 : vector<8x1xf32>
    %c0_4 = arith.constant 0 : index
    %c0_5 = arith.constant 0 : index
    %8 = vector.load %arg4[%c0_4, %c0_5] : memref<8x1xf32, #tpu.memory_space<vmem>>, vector<8x1xf32>
    tpu.vector_store %arg4[%c0_4, %c0_5], %7 {strides = array<i32>} : memref<8x1xf32, #tpu.memory_space<vmem>>, vector<8x1xf32>,
    %c0_6 = arith.constant 0 : index
    %c0_7 = arith.constant 0 : index
    %9 = vector.load %arg5[%c0_6, %c0_7] : memref<8x1xf32, #tpu.memory_space<vmem>>, vector<8x1xf32>
    %10 = arith.mulf %3, %3 : vector<8x256xf32>
    %cst_8 = arith.constant dense<0.000000e+00> : vector<8xf32>
    %11 = vector.multi_reduction <add>, %10, %cst_8 [1] : vector<8x256xf32> to vector<8xf32>
    %12 = vector.shape_cast %11 : vector<8xf32> to vector<8x1xf32>
    %13 = arith.addf %9, %12 : vector<8x1xf32>
    %c0_9 = arith.constant 0 : index
    %c0_10 = arith.constant 0 : index
    %14 = vector.load %arg5[%c0_9, %c0_10] : memref<8x1xf32, #tpu.memory_space<vmem>>, vector<8x1xf32>
    tpu.vector_store %arg5[%c0_9, %c0_10], %13 {strides = array<i32>} : memref<8x1xf32, #tpu.memory_space<vmem>>, vector<8x1xf32>,
    %c0_i32_11 = arith.constant 0 : i32
    %15 = arith.cmpi eq, %arg1, %c0_i32_11 : i32
    %16 = arith.extui %15 : i1 to i32
    %c0_i32_12 = arith.constant 0 : i32
    %17 = arith.cmpi ne, %16, %c0_i32_12 : i32
    scf.if %17 {
      %c0_13 = arith.constant 0 : index
      %c0_14 = arith.constant 0 : index
      %18 = vector.load %arg4[%c0_13, %c0_14] : memref<8x1xf32, #tpu.memory_space<vmem>>, vector<8x1xf32>
      %c0_15 = arith.constant 0 : index
      %c0_16 = arith.constant 0 : index
      %19 = vector.load %arg5[%c0_15, %c0_16] : memref<8x1xf32, #tpu.memory_space<vmem>>, vector<8x1xf32>
      %20 = arith.mulf %18, %18 : vector<8x1xf32>
      %cst_17 = arith.constant 3.906250e-03 : f32
      %21 = vector.broadcast %cst_17 : f32 to vector<8x1xf32>
      %22 = arith.mulf %20, %21 : vector<8x1xf32>
      %23 = arith.subf %19, %22 : vector<8x1xf32>
      %cst_18 = arith.constant 0.00392156886 : f32
      %24 = vector.broadcast %cst_18 : f32 to vector<8x1xf32>
      %25 = arith.mulf %23, %24 : vector<8x1xf32>
      %cst_19 = arith.constant 0.000000e+00 : f32
      %26 = vector.broadcast %cst_19 : f32 to vector<8x1xf32>
      %27 = arith.maximumf %25, %26 : vector<8x1xf32>
      %28 = math.sqrt %27 : vector<8x1xf32>
      %29 = vector.shape_cast %28 : vector<8x1xf32> to vector<8x1xf32>
      %30 = vector.broadcast %29 : vector<8x1xf32> to vector<8x128xf32>
      %c0_20 = arith.constant 0 : index
      %c0_21 = arith.constant 0 : index
      %31 = vector.load %arg3[%c0_20, %c0_21] : memref<8x128xf32, #tpu.memory_space<vmem>>, vector<8x128xf32>
      tpu.vector_store %arg3[%c0_20, %c0_21], %30 {strides = array<i32>} : memref<8x128xf32, #tpu.memory_space<vmem>>, vector<8x128xf32>,
    } else {
    }
    return
  }
  func.func @transform_0(%arg0: i32, %arg1: i32) -> (i32, i32) {
    %c0_i32 = arith.constant 0 : i32
    return %arg0, %arg1 : i32, i32
  }
  func.func @transform_1(%arg0: i32, %arg1: i32) -> (i32, i32) {
    %c0_i32 = arith.constant 0 : i32
    %c0_i32_0 = arith.constant 0 : i32
    return %arg0, %c0_i32 : i32, i32
  }
}

</mosaic_0001>

<llo_original>
// kernel: tpu_custom_call.1
$region0: #{tpu_custom_call.1}
  #allocation0 [shape = 'u32[]', space=smem, size = 0x4, offset = 0x4, fixed_abs, tag = 'smem constant byte address 0x4 - core index']
  #allocation1 [shape = 'u32[72,128]{1,0:T(1,128)}', space=vmem, size = 0x9000, scoped, tag = 'internal scratch']
  #allocation2 [shape = 'f32[8,1]{1,0:T(8,128)}', space=vmem, size = 0x1000, scoped, tag = 'scratch operand']
  #allocation3 [shape = 'f32[8,1]{1,0:T(8,128)}', space=vmem, size = 0x1000, scoped, tag = 'scratch operand']
  %s0 = inlined_call_operand.hbm [shape: f32[8,256], index: 0, kind: input, shape index: {}]
  %s1 = inlined_call_operand.hbm [shape: f32[8,128], index: 1, kind: output, shape index: {}]
  %s2 = sld [smem:[#allocation0]]
  $region26: #{tpu_custom_call.1} parent=0
    _
  %s4 = ssub.s32 1, %s2
  %s5 = scalar_select 0, %s4, %s2
  $region1: #{tpu_custom_call.1} parent=0
    #allocation4 [shape = 'u8[8192]{0}', space=vmem, size = 0x2000, scoped, tag = 'input window, operand 0, single buffered']
    #allocation5 [shape = 's32[1]{0}', space=sflag, size = 0x4, scoped, tag = 'scoped memory for tpu_custom_call.1']
    #allocation6 [shape = 's32[1]{0}', space=sflag, size = 0x4, scoped, tag = 'scoped memory for tpu_custom_call.1']
    #allocation7 [shape = 'u8[4096]{0}', space=vmem, size = 0x1000, scoped, tag = 'output window, operand 0, single buffered']
    %6 = vsyncpa [#allocation5], 0
    %7 = vsyncpa [#allocation6], 0
    // Predicated region
    $region2: #{tpu_custom_call.1} parent=1 // pred_check
      _
    $region3: #{tpu_custom_call.1} parent=1 // pred_check_branch
      %9 = sbr.rel (0) target = $region5
    $region4: #{tpu_custom_call.1} parent=1 // pred_region
      %11 = vsyncadd [#allocation5], 0
      %s13 = sshll.u32 %s0, 4
      %s14 = int_to_ptr.hbm [resolvable:$true] %s13
      %s15 = sshll.u32 [#allocation4], 4
      %s16 = int_to_ptr.vmem [resolvable:$true] %s15
      %18 = dma.hbm_to_vmem [thread:$0]  %s14, 256, %s16, [#allocation5]
    $region5: #{tpu_custom_call.1} parent=1 // pred_fallthru
      _
    // Predicated region
    $region6: #{tpu_custom_call.1} parent=1 // pred_check
      _
    $region7: #{tpu_custom_call.1} parent=1 // pred_check_branch
      %20 = sbr.rel (0) target = $region9
    $region8: #{tpu_custom_call.1} parent=1 // pred_region
      %22 = dma.done [#allocation5], 256
    $region9: #{tpu_custom_call.1} parent=1 // pred_fallthru
      _
    %p23 = scmp.eq.s32.totalorder 0, 0
    // Predicated region
    $region10: #{tpu_custom_call.1} parent=1 // pred_check
      %p24 = pneg %p23
    $region11: #{tpu_custom_call.1} parent=1 // pred_check_branch
      %26 = sbr.rel (%p24) target = $region13
    $region12: #{tpu_custom_call.1} parent=1 // pred_region
      %vm27 = vcmask 7168
      %28 = vst.msk [vmem:[#allocation2] sm:$0xff] %vm27, 0.0
      %29 = vst.msk [vmem:[#allocation3] sm:$0xff] %vm27, 0.0
    $region13: #{tpu_custom_call.1} parent=1 // pred_fallthru
      _
    %v30 = vld [vmem:[#allocation4] sm:$0xff]
    %v31 = vld [vmem:[#allocation4 + $0x8] sm:$0xff]
    %v32 = vld [vmem:[#allocation2] sm:$0xff]
    %v33 = vadd.f32 %v30, %v31
    %34 = vadd.xlane.f32.xlu0 %v33
    %v35 = vpop.xlane.xlu0 %34
    %v36 = vadd.f32 %v32, %v35
    %vm37 = vcmask 7168
    %38 = vst.msk [vmem:[#allocation2] sm:$0xff] %vm37, %v36
    %v39 = vld [vmem:[#allocation3] sm:$0xff]
    %v40 = vmul.f32 %v30, %v30
    %v41 = vmul.f32 %v31, %v31
    %v42 = vadd.f32 %v40, %v41
    %43 = vadd.xlane.f32.xlu0 %v42
    %v44 = vpop.xlane.xlu0 %43
    %v45 = vadd.f32 %v39, %v44
    %46 = vst.msk [vmem:[#allocation3] sm:$0xff] %vm37, %v45
    // Predicated region
    $region14: #{tpu_custom_call.1} parent=1 // pred_check
      %p47 = pneg %p23
    $region15: #{tpu_custom_call.1} parent=1 // pred_check_branch
      %49 = sbr.rel (%p47) target = $region17
    $region16: #{tpu_custom_call.1} parent=1 // pred_region
      %v50 = vld [vmem:[#allocation2] sm:$0xff]
      %v51 = vld [vmem:[#allocation3] sm:$0xff]
      %v52 = vmul.f32 %v50, %v50
      %v53 = vmul.f32 %v52, 0.00390625
      %v54 = vsub.f32 %v51, %v53
      %v55 = vmul.f32 %v54, 0.003921569
      %v56 = vmax.f32 %v55, 0.0
      %v57 = vrsqrt.pop %v56
      %v58 = vmul.f32 %v57, %v56
      %v59 = vmul.f32 %v58, %v57
      %v60 = vmul.f32 0.5, %v59
      %v61 = vsub.f32 1.5, %v60
      %v62 = vmul.f32 %v57, %v61
      %v63 = vmul.f32 %v56, %v62
      %vm64 = vcmp.eq.f32.partialorder %v56, inf
      %v65 = vsel %vm64, %v56, %v63
      %vm66 = vcmp.eq.f32.partialorder %v56, 0.0
      %v67 = vand.u32 %v56, 2147483648
      %v68 = vsel %vm66, %v67, %v65
      %70 = vset.pattern.permute.xlu0 0
      %71 = vperm.xlu0 %70, %v68
      %v72 = vpop.permute.xlu0 %71
      %74 = vst [vmem:[#allocation7] sm:$0xff] %v72
    $region17: #{tpu_custom_call.1} parent=1 // pred_fallthru
      _
    // Predicated region
    $region18: #{tpu_custom_call.1} parent=1 // pred_check
      _
    $region19: #{tpu_custom_call.1} parent=1 // pred_check_branch
      %76 = sbr.rel (0) target = $region21
    $region20: #{tpu_custom_call.1} parent=1 // pred_region
      %78 = vsyncadd [#allocation6], 0
      %s80 = sshll.u32 [#allocation7], 4
      %s81 = int_to_ptr.vmem [resolvable:$true] %s80
      %s82 = sshll.u32 %s1, 4
      %s83 = int_to_ptr.hbm [resolvable:$true] %s82
      %85 = dma.vmem_to_hbm [thread:$0]  %s81, 128, %s83, [#allocation6]
    $region21: #{tpu_custom_call.1} parent=1 // pred_fallthru
      _
    // Predicated region
    $region22: #{tpu_custom_call.1} parent=1 // pred_check
      _
    $region23: #{tpu_custom_call.1} parent=1 // pred_check_branch
      %87 = sbr.rel (0) target = $region25
    $region24: #{tpu_custom_call.1} parent=1 // pred_region
      %89 = dma.done [#allocation6], 128
    $region25: #{tpu_custom_call.1} parent=1 // pred_fallthru
      _
    %90 = vsyncpa [#allocation5], 1
    %91 = vsyncpa [#allocation6], 1

</llo_original>
